<compile_context>
chip_gen: v6e
topology: v6e:2x2x1
jax: 0.10.0
libtpu: 0.0.40
codegen_flags: <defaults>
</compile_context>

<pallas_src>
import jax
import jax.numpy as jnp
from jax import lax
from jax.experimental import pallas as pl
from jax.experimental.pallas import tpu as pltpu

HIDDEN_DIM = 128
TIME_CHUNK = 128     # target serial steps per grid chunk (auto-clamped)


def _vmem_capacity_bytes():
    try:
        return int(pltpu.get_tpu_info().vmem_capacity_bytes)
    except Exception:
        return 64 * 1024 * 1024            # v7x-safe fallback


def birnn_forward(input_ids, attention_mask, params, time_chunk=TIME_CHUNK):
    """Embedding gather + layout in XLA, fused bidirectional recurrence in
    Pallas, PyTorch's 'buggy view' + O=1 FC back in XLA (lane-dense output)."""
    emb_matrix = params["embedding"]                       # (V, E)
    B, T = input_ids.shape
    E = int(emb_matrix.shape[1])
    H = int(params["whh_f"].shape[0])

    # ---- batch padding / batch-parallel tiling (2nd TensorCore on v7x) ------
    Bp = max(8, ((B + 7) // 8) * 8)
    if Bp > 128:
        Bp = ((Bp + 127) // 128) * 128
        Btile = 128
    else:
        Btile = Bp
    NB = Bp // Btile

    # ---- VMEM-aware time-chunk selection (per-generation sizing) ------------
    vmem_cap = _vmem_capacity_bytes()
    budget = vmem_cap // 2
    # per-time-step bytes: emb (2 streams x 2 pipeline buffers, f32) + xp scratch
    per_step = (2 * 2 * E + 2 * H) * Btile * 4
    fixed = (2 * 2 * E * H + 2 * (2 * H) * (2 * H) + 4 * Btile * 2 * H) * 4 + (2 << 20)
    tc_max = max(1, (budget - fixed) // max(per_step, 1))
    TC = int(max(1, min(time_chunk, T, tc_max)))
    Tp = ((T + TC - 1) // TC) * TC
    NC = Tp // TC

    # ---- XLA-side glue: embedding lookup, time-major layout, padding --------
    emb = emb_matrix[input_ids].astype(jnp.float32)        # (B, T, E) gather
    emb = jnp.transpose(emb, (1, 0, 2))                    # (T, B, E)
    emb = jnp.pad(emb, ((0, Tp - T), (0, Bp - B), (0, 0))) # (Tp, Bp, E)
    emb_rev = emb[::-1]                                    # pre-time-reversed copy

    def layout(x):
        # (Tp, Bp, E) -> (NB, Tp*Btile, E): per batch tile, time-major row-blocks.
        x = x.reshape(Tp, NB, Btile, E)
        x = jnp.transpose(x, (1, 0, 2, 3))
        return x.reshape(NB, Tp * Btile, E)

    emb_f = layout(emb)
    emb_b = layout(emb_rev)

    lengths = attention_mask.astype(jnp.int32).sum(axis=1)           # (B,)
    lengths = jnp.pad(lengths, (0, Bp - B)).reshape(Bp, 1)            # (Bp, 1)

    # fused block-diagonal recurrent weight: one MXU push/step for both dirs
    whh_blk = jnp.zeros((2 * H, 2 * H), jnp.float32)
    whh_blk = whh_blk.at[:H, :H].set(params["whh_f"])
    whh_blk = whh_blk.at[H:, H:].set(params["whh_b"])

    # ---- Pallas kernel -------------------------------------------------------
    def kernel(len_ref, embf_ref, embb_ref, wf_ref, wb_ref, bf_ref, bb_ref,
               whh_ref, out_ref, xp_ref):
        c = pl.program_id(1)                               # serial time chunk

        @pl.when(c == 0)
        def _init():                                       # zero initial hidden
            out_ref[...] = jnp.zeros_like(out_ref)

        # Hoisted input projections for this (batch tile, time chunk): both
        # directions, bias folded in, lane-concatenated (fwd -> [:H],
        # bwd (already time-reversed) -> [H:]) so the serial loop reads ONE
        # contiguous (Btile, 2H) slab per step.
        xp_ref[:, :H] = (jnp.dot(embf_ref[...], wf_ref[...],
                                 preferred_element_type=jnp.float32)
                         + bf_ref[...])
        xp_ref[:, H:] = (jnp.dot(embb_ref[...], wb_ref[...],
                                 preferred_element_type=jnp.float32)
                         + bb_ref[...])

        whh = whh_ref[...]                                 # (2H, 2H) block-diag
        lens = len_ref[...]                                # (Btile, 1) int32
        # lane -> direction selector; carried per-lane time index (1 add/step)
        half = lax.broadcasted_iota(jnp.int32, (1, 2 * H), 1) < H
        dir_sign = jnp.where(half, 1, -1).astype(jnp.int32)
        t_lane0 = jnp.where(half, c * TC, Tp - 1 - c * TC).astype(jnp.int32)

        def step(t, carry):
            h, t_lane = carry
            row = t * Btile if isinstance(t, int) else pl.multiple_of(t * Btile, Btile)
            xp = xp_ref[pl.ds(row, Btile), :]              # (Btile, 2H)
            h_new = jnp.tanh(
                jnp.dot(h, whh, preferred_element_type=jnp.float32) + xp)
            # pack_padded_sequence semantics: advance only while time < length
            h = jnp.where(t_lane < lens, h_new, h)
            return h, t_lane + dir_sign

        carry = (out_ref[...], t_lane0)
        if TC <= 16:                                       # demo: full unroll
            for t in range(TC):
                carry = step(t, carry)
        else:                                              # long chunks
            carry = lax.fori_loop(0, TC, step, carry, unroll=8)
        out_ref[...] = carry[0]

    flops = (2 * 2 * Tp * Bp * E * H           # input projections (both dirs)
             + 2 * 2 * Tp * Bp * H * H)        # recurrence (true flops)
    transcendentals = Tp * Bp * 2 * H
    bytes_accessed = 4 * (2 * Tp * Bp * E + 2 * E * H + (2 * H) * (2 * H)
                          + 2 * H + Bp + Bp * 2 * H)

    vmem_needed = per_step * TC + fixed
    vmem_limit = int(min(max(vmem_needed, 32 << 20), vmem_cap - (2 << 20)))

    h_all = pl.pallas_call(
        kernel,
        out_shape=jax.ShapeDtypeStruct((Bp, 2 * H), jnp.float32),
        grid_spec=pltpu.PrefetchScalarGridSpec(
            num_scalar_prefetch=0,
            grid=(NB, NC),                     # (parallel batch tiles, serial chunks)
            in_specs=[
                pl.BlockSpec((Btile, 1), lambda bi, c: (bi, 0)),                # lengths
                pl.BlockSpec((None, TC * Btile, E), lambda bi, c: (bi, c, 0)),  # emb fwd
                pl.BlockSpec((None, TC * Btile, E), lambda bi, c: (bi, c, 0)),  # emb bwd (rev)
                pl.BlockSpec((E, H), lambda bi, c: (0, 0)),                     # W_ih fwd
                pl.BlockSpec((E, H), lambda bi, c: (0, 0)),                     # W_ih bwd
                pl.BlockSpec((1, H), lambda bi, c: (0, 0)),                     # b fwd
                pl.BlockSpec((1, H), lambda bi, c: (0, 0)),                     # b bwd
                pl.BlockSpec((2 * H, 2 * H), lambda bi, c: (0, 0)),             # W_hh blk
            ],
            out_specs=pl.BlockSpec((Btile, 2 * H), lambda bi, c: (bi, 0)),      # resident over c
            scratch_shapes=[pltpu.VMEM((TC * Btile, 2 * H), jnp.float32)],
        ),
        compiler_params=pltpu.CompilerParams(
            dimension_semantics=("parallel", "arbitrary"),
            vmem_limit_bytes=vmem_limit),
        cost_estimate=pl.CostEstimate(
            flops=flops, transcendentals=transcendentals,
            bytes_accessed=bytes_accessed),
    )(lengths, emb_f, emb_b,
      params["wih_f"], params["wih_b"], params["b_f"], params["b_b"], whh_blk)

    # ---- XLA epilogue: PyTorch's (2, B, H).view(B, 2H) "buggy" view + tiny FC
    h_f = h_all[:B, :H]
    h_b = h_all[:B, H:]
    final = jnp.concatenate([h_f, h_b], axis=0).reshape(B, 2 * H)
    return final @ params["fc_w"] + params["fc_b"]


def birnn_reference(input_ids, attention_mask, params):
    """Pure-JAX reference mirroring the PyTorch forward (f32)."""
    emb = params["embedding"][input_ids]                   # (B, T, E)
    B, T, E = emb.shape
    H = params["whh_f"].shape[0]
    mask = attention_mask.astype(jnp.float32)

    def run_dir(wih, whh, b, reverse):
        h = jnp.zeros((B, H), jnp.float32)
        ts = range(T - 1, -1, -1) if reverse else range(T)
        for t in ts:
            x = emb[:, t, :]
            m = mask[:, t:t + 1]
            h_new = jnp.tanh(x @ wih + h @ whh + b)
            h = m * h_new + (1.0 - m) * h
        return h

    h_f = run_dir(params["wih_f"], params["whh_f"], params["b_f"], False)
    h_b = run_dir(params["wih_b"], params["whh_b"], params["b_b"], True)
    final = jnp.concatenate([h_f, h_b], axis=0).reshape(B, 2 * H)
    return final @ params["fc_w"] + params["fc_b"]


def make_params(key, vocab, emb_dim, hidden_dim, out_dim):
    ks = jax.random.split(key, 10)
    s = 1.0 / jnp.sqrt(hidden_dim)
    u = lambda k, shape: jax.random.uniform(k, shape, jnp.float32, -s, s)
    return {
        "embedding": jax.random.normal(ks[0], (vocab, emb_dim), jnp.float32),
        "wih_f": u(ks[1], (emb_dim, hidden_dim)),
        "whh_f": u(ks[2], (hidden_dim, hidden_dim)),
        "b_f":   u(ks[3], (1, hidden_dim)),                # = b_ih + b_hh (combined)
        "wih_b": u(ks[4], (emb_dim, hidden_dim)),
        "whh_b": u(ks[5], (hidden_dim, hidden_dim)),
        "b_b":   u(ks[6], (1, hidden_dim)),
        "fc_w":  u(ks[7], (2 * hidden_dim, out_dim)),
        "fc_b":  u(ks[8], (1, out_dim)),
    }


if __name__ == "__main__":
    B, T, V, E, H, O = 2, 8, 50, 32, HIDDEN_DIM, 1

    key = jax.random.PRNGKey(0)
    k_ids, k_par = jax.random.split(key)
    params = make_params(k_par, V, E, H, O)

    input_ids = jax.random.randint(k_ids, (B, T), 0, V, dtype=jnp.int32)
    lengths = jnp.array([T, 5], dtype=jnp.int32)           # prefix-valid masks
    attention_mask = (jnp.arange(T)[None, :] < lengths[:, None]).astype(jnp.int32)

    out = birnn_forward(input_ids, attention_mask, params)
    out = jax.block_until_ready(out)

    ref = birnn_reference(input_ids, attention_mask, params)
    assert out.shape == (B, O)
    assert jnp.allclose(out, ref, atol=1e-3, rtol=1e-3), (out, ref)

    print("KERNEL_OK")
</pallas_src>

<mosaic_0001>
module attributes {stable_mosaic.version = 11 : i64} {
  func.func @kernel(%arg0: i32, %arg1: i32, %arg2: memref<8x1xi32, #tpu.memory_space<vmem>>, %arg3: memref<1x64x32xf32, #tpu.memory_space<vmem>>, %arg4: memref<1x64x32xf32, #tpu.memory_space<vmem>>, %arg5: memref<32x128xf32, #tpu.memory_space<vmem>>, %arg6: memref<32x128xf32, #tpu.memory_space<vmem>>, %arg7: memref<1x128xf32, #tpu.memory_space<vmem>>, %arg8: memref<1x128xf32, #tpu.memory_space<vmem>>, %arg9: memref<256x256xf32, #tpu.memory_space<vmem>>, %arg10: memref<8x256xf32, #tpu.memory_space<vmem>>, %arg11: memref<64x256xf32, #tpu.memory_space<vmem>>) attributes {dimension_semantics = [#tpu.dimension_semantics<parallel>, #tpu.dimension_semantics<arbitrary>], iteration_bounds = array<i64: 1, 1>, scalar_prefetch = 0 : i64, scratch_operands = 1 : i64, tpu.core_type = #tpu.core_type<tc>, window_params = [{transform_indices = @transform_0, window_bounds = array<i64: 8, 1>}, {transform_indices = @transform_1, window_bounds = array<i64: 1, 64, 32>}, {transform_indices = @transform_2, window_bounds = array<i64: 1, 64, 32>}, {pipeline_mode = #tpu.pipeline_mode<synchronous>, transform_indices = @transform_3, window_bounds = array<i64: 32, 128>}, {pipeline_mode = #tpu.pipeline_mode<synchronous>, transform_indices = @transform_4, window_bounds = array<i64: 32, 128>}, {pipeline_mode = #tpu.pipeline_mode<synchronous>, transform_indices = @transform_5, window_bounds = array<i64: 1, 128>}, {pipeline_mode = #tpu.pipeline_mode<synchronous>, transform_indices = @transform_6, window_bounds = array<i64: 1, 128>}, {pipeline_mode = #tpu.pipeline_mode<synchronous>, transform_indices = @transform_7, window_bounds = array<i64: 256, 256>}, {transform_indices = @transform_8, window_bounds = array<i64: 8, 256>}]} {
    %c0_i32 = arith.constant 0 : i32
    %0 = arith.cmpi eq, %arg1, %c0_i32 : i32
    %1 = arith.extui %0 : i1 to i32
    %c0_i32_0 = arith.constant 0 : i32
    %2 = arith.cmpi ne, %1, %c0_i32_0 : i32
    scf.if %2 {
      %cst_44 = arith.constant 0.000000e+00 : f32
      %106 = vector.broadcast %cst_44 : f32 to vector<8x256xf32>
      %c0_45 = arith.constant 0 : index
      %c0_46 = arith.constant 0 : index
      %107 = vector.load %arg10[%c0_45, %c0_46] : memref<8x256xf32, #tpu.memory_space<vmem>>, vector<8x256xf32>
      tpu.vector_store %arg10[%c0_45, %c0_46], %106 {strides = array<i32>} : memref<8x256xf32, #tpu.memory_space<vmem>>, vector<8x256xf32>,
    } else {
    }
    %c0 = arith.constant 0 : index
    %c0_1 = arith.constant 0 : index
    %c0_2 = arith.constant 0 : index
    %3 = vector.load %arg3[%c0, %c0_1, %c0_2] : memref<1x64x32xf32, #tpu.memory_space<vmem>>, vector<1x64x32xf32>
    %4 = vector.shape_cast %3 : vector<1x64x32xf32> to vector<64x32xf32>
    %c0_3 = arith.constant 0 : index
    %c0_4 = arith.constant 0 : index
    %5 = vector.load %arg5[%c0_3, %c0_4] : memref<32x128xf32, #tpu.memory_space<vmem>>, vector<32x128xf32>
    %cst = arith.constant dense<0.000000e+00> : vector<64x128xf32>
    %6 = tpu.matmul %4, %5, %cst {dimension_numbers = #tpu.dot_dimension_numbers<[1], [0], [0], [1], [0, 0, 1, 1], [], []>} : vector<64x32xf32>, vector<32x128xf32>, vector<64x128xf32> -> vector<64x128xf32>
    %c0_5 = arith.constant 0 : index
    %c0_6 = arith.constant 0 : index
    %7 = vector.load %arg7[%c0_5, %c0_6] : memref<1x128xf32, #tpu.memory_space<vmem>>, vector<1x128xf32>
    %8 = vector.broadcast %7 : vector<1x128xf32> to vector<64x128xf32>
    %9 = arith.addf %6, %8 : vector<64x128xf32>
    %c0_7 = arith.constant 0 : index
    %c0_8 = arith.constant 0 : index
    %10 = vector.load %arg11[%c0_7, %c0_8] : memref<64x256xf32, #tpu.memory_space<vmem>>, vector<64x128xf32>
    tpu.vector_store %arg11[%c0_7, %c0_8], %9 {strides = array<i32>} : memref<64x256xf32, #tpu.memory_space<vmem>>, vector<64x128xf32>,
    %c0_9 = arith.constant 0 : index
    %c0_10 = arith.constant 0 : index
    %c0_11 = arith.constant 0 : index
    %11 = vector.load %arg4[%c0_9, %c0_10, %c0_11] : memref<1x64x32xf32, #tpu.memory_space<vmem>>, vector<1x64x32xf32>
    %12 = vector.shape_cast %11 : vector<1x64x32xf32> to vector<64x32xf32>
    %c0_12 = arith.constant 0 : index
    %c0_13 = arith.constant 0 : index
    %13 = vector.load %arg6[%c0_12, %c0_13] : memref<32x128xf32, #tpu.memory_space<vmem>>, vector<32x128xf32>
    %cst_14 = arith.constant dense<0.000000e+00> : vector<64x128xf32>
    %14 = tpu.matmul %12, %13, %cst_14 {dimension_numbers = #tpu.dot_dimension_numbers<[1], [0], [0], [1], [0, 0, 1, 1], [], []>} : vector<64x32xf32>, vector<32x128xf32>, vector<64x128xf32> -> vector<64x128xf32>
    %c0_15 = arith.constant 0 : index
    %c0_16 = arith.constant 0 : index
    %15 = vector.load %arg8[%c0_15, %c0_16] : memref<1x128xf32, #tpu.memory_space<vmem>>, vector<1x128xf32>
    %16 = vector.broadcast %15 : vector<1x128xf32> to vector<64x128xf32>
    %17 = arith.addf %14, %16 : vector<64x128xf32>
    %c0_17 = arith.constant 0 : index
    %c128 = arith.constant 128 : index
    %18 = vector.load %arg11[%c0_17, %c128] : memref<64x256xf32, #tpu.memory_space<vmem>>, vector<64x128xf32>
    tpu.vector_store %arg11[%c0_17, %c128], %17 {strides = array<i32>} : memref<64x256xf32, #tpu.memory_space<vmem>>, vector<64x128xf32>,
    %c0_18 = arith.constant 0 : index
    %c0_19 = arith.constant 0 : index
    %19 = vector.load %arg9[%c0_18, %c0_19] : memref<256x256xf32, #tpu.memory_space<vmem>>, vector<256x256xf32>
    %c0_20 = arith.constant 0 : index
    %c0_21 = arith.constant 0 : index
    %20 = vector.load %arg2[%c0_20, %c0_21] : memref<8x1xi32, #tpu.memory_space<vmem>>, vector<8x1xi32>
    %21 = tpu.iota {dimensions = array<i32: 1>} : vector<1x256xi32>
    %c128_i32 = arith.constant 128 : i32
    %22 = vector.broadcast %c128_i32 : i32 to vector<1x256xi32>
    %23 = arith.cmpi slt, %21, %22 : vector<1x256xi32>
    %c1_i32 = arith.constant 1 : i32
    %c-1_i32 = arith.constant -1 : i32
    %24 = vector.broadcast %c1_i32 : i32 to vector<1x256xi32>
    %25 = vector.broadcast %c-1_i32 : i32 to vector<1x256xi32>
    %26 = arith.select %23, %24, %25 : vector<1x256xi1>, vector<1x256xi32>
    %c8_i32 = arith.constant 8 : i32
    %27 = arith.muli %arg1, %c8_i32 : i32
    %c8_i32_22 = arith.constant 8 : i32
    %28 = arith.muli %arg1, %c8_i32_22 : i32
    %c7_i32 = arith.constant 7 : i32
    %29 = arith.subi %c7_i32, %28 : i32
    %30 = vector.broadcast %27 : i32 to vector<1x256xi32>
    %31 = vector.broadcast %29 : i32 to vector<1x256xi32>
    %32 = arith.select %23, %30, %31 : vector<1x256xi1>, vector<1x256xi32>
    %c0_23 = arith.constant 0 : index
    %c0_24 = arith.constant 0 : index
    %33 = vector.load %arg10[%c0_23, %c0_24] : memref<8x256xf32, #tpu.memory_space<vmem>>, vector<8x256xf32>
    %c0_25 = arith.constant 0 : index
    %c0_26 = arith.constant 0 : index
    %34 = vector.load %arg11[%c0_25, %c0_26] : memref<64x256xf32, #tpu.memory_space<vmem>>, vector<8x256xf32>
    %cst_27 = arith.constant dense<0.000000e+00> : vector<8x256xf32>
    %35 = tpu.matmul %33, %19, %cst_27 {dimension_numbers = #tpu.dot_dimension_numbers<[1], [0], [0], [1], [0, 0, 1, 1], [], []>} : vector<8x256xf32>, vector<256x256xf32>, vector<8x256xf32> -> vector<8x256xf32>
    %36 = arith.addf %35, %34 : vector<8x256xf32>
    %37 = math.tanh %36 : vector<8x256xf32>
    %38 = vector.broadcast %32 : vector<1x256xi32> to vector<8x256xi32>
    %39 = vector.broadcast %20 : vector<8x1xi32> to vector<8x256xi32>
    %40 = arith.cmpi slt, %38, %39 : vector<8x256xi32>
    %41 = arith.select %40, %37, %33 : vector<8x256xi1>, vector<8x256xf32>
    %42 = arith.addi %32, %26 : vector<1x256xi32>
    %c8 = arith.constant 8 : index
    %c0_28 = arith.constant 0 : index
    %43 = vector.load %arg11[%c8, %c0_28] : memref<64x256xf32, #tpu.memory_space<vmem>>, vector<8x256xf32>
    %cst_29 = arith.constant dense<0.000000e+00> : vector<8x256xf32>
    %44 = tpu.matmul %41, %19, %cst_29 {dimension_numbers = #tpu.dot_dimension_numbers<[1], [0], [0], [1], [0, 0, 1, 1], [], []>} : vector<8x256xf32>, vector<256x256xf32>, vector<8x256xf32> -> vector<8x256xf32>
    %45 = arith.addf %44, %43 : vector<8x256xf32>
    %46 = math.tanh %45 : vector<8x256xf32>
    %47 = vector.broadcast %42 : vector<1x256xi32> to vector<8x256xi32>
    %48 = vector.broadcast %20 : vector<8x1xi32> to vector<8x256xi32>
    %49 = arith.cmpi slt, %47, %48 : vector<8x256xi32>
    %50 = arith.select %49, %46, %41 : vector<8x256xi1>, vector<8x256xf32>
    %51 = arith.addi %42, %26 : vector<1x256xi32>
    %c16 = arith.constant 16 : index
    %c0_30 = arith.constant 0 : index
    %52 = vector.load %arg11[%c16, %c0_30] : memref<64x256xf32, #tpu.memory_space<vmem>>, vector<8x256xf32>
    %cst_31 = arith.constant dense<0.000000e+00> : vector<8x256xf32>
    %53 = tpu.matmul %50, %19, %cst_31 {dimension_numbers = #tpu.dot_dimension_numbers<[1], [0], [0], [1], [0, 0, 1, 1], [], []>} : vector<8x256xf32>, vector<256x256xf32>, vector<8x256xf32> -> vector<8x256xf32>
    %54 = arith.addf %53, %52 : vector<8x256xf32>
    %55 = math.tanh %54 : vector<8x256xf32>
    %56 = vector.broadcast %51 : vector<1x256xi32> to vector<8x256xi32>
    %57 = vector.broadcast %20 : vector<8x1xi32> to vector<8x256xi32>
    %58 = arith.cmpi slt, %56, %57 : vector<8x256xi32>
    %59 = arith.select %58, %55, %50 : vector<8x256xi1>, vector<8x256xf32>
    %60 = arith.addi %51, %26 : vector<1x256xi32>
    %c24 = arith.constant 24 : index
    %c0_32 = arith.constant 0 : index
    %61 = vector.load %arg11[%c24, %c0_32] : memref<64x256xf32, #tpu.memory_space<vmem>>, vector<8x256xf32>
    %cst_33 = arith.constant dense<0.000000e+00> : vector<8x256xf32>
    %62 = tpu.matmul %59, %19, %cst_33 {dimension_numbers = #tpu.dot_dimension_numbers<[1], [0], [0], [1], [0, 0, 1, 1], [], []>} : vector<8x256xf32>, vector<256x256xf32>, vector<8x256xf32> -> vector<8x256xf32>
    %63 = arith.addf %62, %61 : vector<8x256xf32>
    %64 = math.tanh %63 : vector<8x256xf32>
    %65 = vector.broadcast %60 : vector<1x256xi32> to vector<8x256xi32>
    %66 = vector.broadcast %20 : vector<8x1xi32> to vector<8x256xi32>
    %67 = arith.cmpi slt, %65, %66 : vector<8x256xi32>
    %68 = arith.select %67, %64, %59 : vector<8x256xi1>, vector<8x256xf32>
    %69 = arith.addi %60, %26 : vector<1x256xi32>
    %c32 = arith.constant 32 : index
    %c0_34 = arith.constant 0 : index
    %70 = vector.load %arg11[%c32, %c0_34] : memref<64x256xf32, #tpu.memory_space<vmem>>, vector<8x256xf32>
    %cst_35 = arith.constant dense<0.000000e+00> : vector<8x256xf32>
    %71 = tpu.matmul %68, %19, %cst_35 {dimension_numbers = #tpu.dot_dimension_numbers<[1], [0], [0], [1], [0, 0, 1, 1], [], []>} : vector<8x256xf32>, vector<256x256xf32>, vector<8x256xf32> -> vector<8x256xf32>
    %72 = arith.addf %71, %70 : vector<8x256xf32>
    %73 = math.tanh %72 : vector<8x256xf32>
    %74 = vector.broadcast %69 : vector<1x256xi32> to vector<8x256xi32>
    %75 = vector.broadcast %20 : vector<8x1xi32> to vector<8x256xi32>
    %76 = arith.cmpi slt, %74, %75 : vector<8x256xi32>
    %77 = arith.select %76, %73, %68 : vector<8x256xi1>, vector<8x256xf32>
    %78 = arith.addi %69, %26 : vector<1x256xi32>
    %c40 = arith.constant 40 : index
    %c0_36 = arith.constant 0 : index
    %79 = vector.load %arg11[%c40, %c0_36] : memref<64x256xf32, #tpu.memory_space<vmem>>, vector<8x256xf32>
    %cst_37 = arith.constant dense<0.000000e+00> : vector<8x256xf32>
    %80 = tpu.matmul %77, %19, %cst_37 {dimension_numbers = #tpu.dot_dimension_numbers<[1], [0], [0], [1], [0, 0, 1, 1], [], []>} : vector<8x256xf32>, vector<256x256xf32>, vector<8x256xf32> -> vector<8x256xf32>
    %81 = arith.addf %80, %79 : vector<8x256xf32>
    %82 = math.tanh %81 : vector<8x256xf32>
    %83 = vector.broadcast %78 : vector<1x256xi32> to vector<8x256xi32>
    %84 = vector.broadcast %20 : vector<8x1xi32> to vector<8x256xi32>
    %85 = arith.cmpi slt, %83, %84 : vector<8x256xi32>
    %86 = arith.select %85, %82, %77 : vector<8x256xi1>, vector<8x256xf32>
    %87 = arith.addi %78, %26 : vector<1x256xi32>
    %c48 = arith.constant 48 : index
    %c0_38 = arith.constant 0 : index
    %88 = vector.load %arg11[%c48, %c0_38] : memref<64x256xf32, #tpu.memory_space<vmem>>, vector<8x256xf32>
    %cst_39 = arith.constant dense<0.000000e+00> : vector<8x256xf32>
    %89 = tpu.matmul %86, %19, %cst_39 {dimension_numbers = #tpu.dot_dimension_numbers<[1], [0], [0], [1], [0, 0, 1, 1], [], []>} : vector<8x256xf32>, vector<256x256xf32>, vector<8x256xf32> -> vector<8x256xf32>
    %90 = arith.addf %89, %88 : vector<8x256xf32>
    %91 = math.tanh %90 : vector<8x256xf32>
    %92 = vector.broadcast %87 : vector<1x256xi32> to vector<8x256xi32>
    %93 = vector.broadcast %20 : vector<8x1xi32> to vector<8x256xi32>
    %94 = arith.cmpi slt, %92, %93 : vector<8x256xi32>
    %95 = arith.select %94, %91, %86 : vector<8x256xi1>, vector<8x256xf32>
    %96 = arith.addi %87, %26 : vector<1x256xi32>
    %c56 = arith.constant 56 : index
    %c0_40 = arith.constant 0 : index
    %97 = vector.load %arg11[%c56, %c0_40] : memref<64x256xf32, #tpu.memory_space<vmem>>, vector<8x256xf32>
    %cst_41 = arith.constant dense<0.000000e+00> : vector<8x256xf32>
    %98 = tpu.matmul %95, %19, %cst_41 {dimension_numbers = #tpu.dot_dimension_numbers<[1], [0], [0], [1], [0, 0, 1, 1], [], []>} : vector<8x256xf32>, vector<256x256xf32>, vector<8x256xf32> -> vector<8x256xf32>
    %99 = arith.addf %98, %97 : vector<8x256xf32>
    %100 = math.tanh %99 : vector<8x256xf32>
    %101 = vector.broadcast %96 : vector<1x256xi32> to vector<8x256xi32>
    %102 = vector.broadcast %20 : vector<8x1xi32> to vector<8x256xi32>
    %103 = arith.cmpi slt, %101, %102 : vector<8x256xi32>
    %104 = arith.select %103, %100, %95 : vector<8x256xi1>, vector<8x256xf32>
    %c0_42 = arith.constant 0 : index
    %c0_43 = arith.constant 0 : index
    %105 = vector.load %arg10[%c0_42, %c0_43] : memref<8x256xf32, #tpu.memory_space<vmem>>, vector<8x256xf32>
    tpu.vector_store %arg10[%c0_42, %c0_43], %104 {strides = array<i32>} : memref<8x256xf32, #tpu.memory_space<vmem>>, vector<8x256xf32>,
    return
  }
  func.func @transform_0(%arg0: i32, %arg1: i32) -> (i32, i32) {
    %c0_i32 = arith.constant 0 : i32
    %c0_i32_0 = arith.constant 0 : i32
    return %arg0, %c0_i32 : i32, i32
  }
  func.func @transform_1(%arg0: i32, %arg1: i32) -> (i32, i32, i32) {
    %c0_i32 = arith.constant 0 : i32
    %c0_i32_0 = arith.constant 0 : i32
    return %arg0, %arg1, %c0_i32 : i32, i32, i32
  }
  func.func @transform_2(%arg0: i32, %arg1: i32) -> (i32, i32, i32) {
    %c0_i32 = arith.constant 0 : i32
    %c0_i32_0 = arith.constant 0 : i32
    return %arg0, %arg1, %c0_i32 : i32, i32, i32
  }
  func.func @transform_3(%arg0: i32, %arg1: i32) -> (i32, i32) {
    %c0_i32 = arith.constant 0 : i32
    %c0_i32_0 = arith.constant 0 : i32
    %c0_i32_1 = arith.constant 0 : i32
    return %c0_i32, %c0_i32_0 : i32, i32
  }
  func.func @transform_4(%arg0: i32, %arg1: i32) -> (i32, i32) {
    %c0_i32 = arith.constant 0 : i32
    %c0_i32_0 = arith.constant 0 : i32
    %c0_i32_1 = arith.constant 0 : i32
    return %c0_i32, %c0_i32_0 : i32, i32
  }
  func.func @transform_5(%arg0: i32, %arg1: i32) -> (i32, i32) {
    %c0_i32 = arith.constant 0 : i32
    %c0_i32_0 = arith.constant 0 : i32
    %c0_i32_1 = arith.constant 0 : i32
    return %c0_i32, %c0_i32_0 : i32, i32
  }
  func.func @transform_6(%arg0: i32, %arg1: i32) -> (i32, i32) {
    %c0_i32 = arith.constant 0 : i32
    %c0_i32_0 = arith.constant 0 : i32
    %c0_i32_1 = arith.constant 0 : i32
    return %c0_i32, %c0_i32_0 : i32, i32
  }
  func.func @transform_7(%arg0: i32, %arg1: i32) -> (i32, i32) {
    %c0_i32 = arith.constant 0 : i32
    %c0_i32_0 = arith.constant 0 : i32
    %c0_i32_1 = arith.constant 0 : i32
    return %c0_i32, %c0_i32_0 : i32, i32
  }
  func.func @transform_8(%arg0: i32, %arg1: i32) -> (i32, i32) {
    %c0_i32 = arith.constant 0 : i32
    %c0_i32_0 = arith.constant 0 : i32
    return %arg0, %c0_i32 : i32, i32
  }
}

</mosaic_0001>

<llo_original>
// kernel: tpu_custom_call.1
$region0: #{tpu_custom_call.1}
  #allocation0 [shape = 'u32[]', space=smem, size = 0x4, offset = 0x4, fixed_abs, tag = 'smem constant byte address 0x4 - core index']
  #allocation1 [shape = 'u32[144,128]{1,0:T(1,128)}', space=vmem, size = 0x12000, scoped, tag = 'internal scratch']
  #allocation2 [shape = 'f32[64,256]{1,0:T(8,128)}', space=vmem, size = 0x10000, scoped, tag = 'scratch operand']
  %s0 = inlined_call_operand.vmem [shape: s32[8,1], index: 0, kind: input, shape index: {}]
  %s1 = inlined_call_operand.vmem [shape: f32[1,64,32], index: 1, kind: input, shape index: {}]
  %s2 = inlined_call_operand.vmem [shape: f32[1,64,32], index: 2, kind: input, shape index: {}]
  %s3 = inlined_call_operand.vmem [shape: f32[32,128], index: 3, kind: input, shape index: {}]
  %s4 = inlined_call_operand.vmem [shape: f32[32,128], index: 4, kind: input, shape index: {}]
  %s5 = inlined_call_operand.vmem [shape: f32[1,128], index: 5, kind: input, shape index: {}]
  %s6 = inlined_call_operand.vmem [shape: f32[1,128], index: 6, kind: input, shape index: {}]
  %s7 = inlined_call_operand.hbm [shape: f32[256,256], index: 7, kind: input, shape index: {}]
  %s8 = inlined_call_operand.hbm [shape: f32[8,256], index: 8, kind: output, shape index: {}]
  %s9 = sld [smem:[#allocation0]]
  $region50: #{tpu_custom_call.1} parent=0
    _
  %s11 = ssub.s32 1, %s9
  %s12 = scalar_select 0, %s11, %s9
  $region1: #{tpu_custom_call.1} parent=0
    #allocation3 [shape = 'u8[262144]{0}', space=vmem, size = 0x40000, scoped, tag = 'input window, operand 7, single buffered']
    #allocation4 [shape = 's32[1]{0}', space=sflag, size = 0x4, scoped, tag = 'scoped memory for tpu_custom_call.1']
    #allocation5 [shape = 's32[1]{0}', space=sflag, size = 0x4, scoped, tag = 'scoped memory for tpu_custom_call.1']
    #allocation6 [shape = 'u8[8192]{0}', space=vmem, size = 0x2000, scoped, tag = 'output window, operand 0, single buffered']
    %13 = vsyncpa [#allocation4], 0
    %14 = vsyncpa [#allocation5], 0
    // Predicated region
    $region2: #{tpu_custom_call.1} parent=1 // pred_check
      _
    $region3: #{tpu_custom_call.1} parent=1 // pred_check_branch
      %16 = sbr.rel (0) target = $region5
    $region4: #{tpu_custom_call.1} parent=1 // pred_region
      _
    $region5: #{tpu_custom_call.1} parent=1 // pred_fallthru
      _
    // Predicated region
    $region6: #{tpu_custom_call.1} parent=1 // pred_check
      _
    $region7: #{tpu_custom_call.1} parent=1 // pred_check_branch
      %18 = sbr.rel (0) target = $region9
    $region8: #{tpu_custom_call.1} parent=1 // pred_region
      _
    $region9: #{tpu_custom_call.1} parent=1 // pred_fallthru
      _
    // Predicated region
    $region10: #{tpu_custom_call.1} parent=1 // pred_check
      _
    $region11: #{tpu_custom_call.1} parent=1 // pred_check_branch
      %20 = sbr.rel (0) target = $region13
    $region12: #{tpu_custom_call.1} parent=1 // pred_region
      _
    $region13: #{tpu_custom_call.1} parent=1 // pred_fallthru
      _
    // Predicated region
    $region14: #{tpu_custom_call.1} parent=1 // pred_check
      _
    $region15: #{tpu_custom_call.1} parent=1 // pred_check_branch
      %22 = sbr.rel (0) target = $region17
    $region16: #{tpu_custom_call.1} parent=1 // pred_region
      _
    $region17: #{tpu_custom_call.1} parent=1 // pred_fallthru
      _
    // Predicated region
    $region18: #{tpu_custom_call.1} parent=1 // pred_check
      _
    $region19: #{tpu_custom_call.1} parent=1 // pred_check_branch
      %24 = sbr.rel (0) target = $region21
    $region20: #{tpu_custom_call.1} parent=1 // pred_region
      _
    $region21: #{tpu_custom_call.1} parent=1 // pred_fallthru
      _
    // Predicated region
    $region22: #{tpu_custom_call.1} parent=1 // pred_check
      _
    $region23: #{tpu_custom_call.1} parent=1 // pred_check_branch
      %26 = sbr.rel (0) target = $region25
    $region24: #{tpu_custom_call.1} parent=1 // pred_region
      _
    $region25: #{tpu_custom_call.1} parent=1 // pred_fallthru
      _
    // Predicated region
    $region26: #{tpu_custom_call.1} parent=1 // pred_check
      _
    $region27: #{tpu_custom_call.1} parent=1 // pred_check_branch
      %28 = sbr.rel (0) target = $region29
    $region28: #{tpu_custom_call.1} parent=1 // pred_region
      _
    $region29: #{tpu_custom_call.1} parent=1 // pred_fallthru
      _
    // Predicated region
    $region30: #{tpu_custom_call.1} parent=1 // pred_check
      _
    $region31: #{tpu_custom_call.1} parent=1 // pred_check_branch
      %30 = sbr.rel (0) target = $region33
    $region32: #{tpu_custom_call.1} parent=1 // pred_region
      %s32 = ssub.s32 8192, 8192
      %33 = vsyncadd [#allocation4], %s32
      %s34 = sshll.u32 [#allocation3], 4
      %s35 = int_to_ptr.vmem [resolvable:$true] %s34
      %40 = dma.hbm_to_vmem [thread:$0]  %s7, 8192, %s35, [#allocation4], 256, 256, 16
    $region33: #{tpu_custom_call.1} parent=1 // pred_fallthru
      _
    // Predicated region
    $region34: #{tpu_custom_call.1} parent=1 // pred_check
      _
    $region35: #{tpu_custom_call.1} parent=1 // pred_check_branch
      %42 = sbr.rel (0) target = $region37
    $region36: #{tpu_custom_call.1} parent=1 // pred_region
      %43 = dma.done [#allocation4], 8192
    $region37: #{tpu_custom_call.1} parent=1 // pred_fallthru
      _
    %p44 = scmp.eq.s32.totalorder 0, 0
    // Predicated region
    $region38: #{tpu_custom_call.1} parent=1 // pred_check
      %p45 = pneg %p44
    $region39: #{tpu_custom_call.1} parent=1 // pred_check_branch
      %47 = sbr.rel (%p45) target = $region41
    $region40: #{tpu_custom_call.1} parent=1 // pred_region
      %48 = vst [vmem:[#allocation6] sm:$0xff] 0.0
      %49 = vst [vmem:[#allocation6 + $0x8] sm:$0xff] 0.0
    $region41: #{tpu_custom_call.1} parent=1 // pred_fallthru
      _
    %v50 = vld [vmem:[%s1] sm:$0xff]
    %v51 = vld [vmem:[%s1 + $0x8] sm:$0xff]
    %v52 = vld [vmem:[%s1 + $0x10] sm:$0xff]
    %v53 = vld [vmem:[%s1 + $0x18] sm:$0xff]
    %v54 = vld [vmem:[%s1 + $0x20] sm:$0xff]
    %v55 = vld [vmem:[%s1 + $0x28] sm:$0xff]
    %v56 = vld [vmem:[%s1 + $0x30] sm:$0xff]
    %v57 = vld [vmem:[%s1 + $0x38] sm:$0xff]
    %v58 = vld [vmem:[%s3] sm:$0xff]
    %v59 = vld [vmem:[%s3 + $0x8] sm:$0xff]
    %v60 = vld [vmem:[%s3 + $0x10] sm:$0xff]
    %v61 = vld [vmem:[%s3 + $0x18] sm:$0xff]
    %v62 = vld [vmem:[%s5] sm:$0x1]
    %v64 = vlaneseq
    %v65 = vshrl.u32 %v64, 7
    %v66 = vsub.s32 0, %v65
    %v67 = vrot.slane %v62, %v66
    %vm69 = vcmask 261120
    %v71 = vsel %vm69, %v50, 0
    %v74 = vsel %vm69, %v51, 0
    %v77 = vsel %vm69, %v52, 0
    %v80 = vsel %vm69, %v53, 0
    %v83 = vsel %vm69, %v54, 0
    %v86 = vsel %vm69, %v55, 0
    %v89 = vsel %vm69, %v56, 0
    %v92 = vsel %vm69, %v57, 0
    %94 = vmatprep.subr.mxu0 0.0
    %95 = vmatpush1.msra.mxu0 0.0
    %96 = vmatprep.subr.mxu0 0.0
    %97 = vmatpush1.msra.mxu0 0.0
    %98 = vmatprep.subr.mxu0 0.0
    %99 = vmatpush1.msra.mxu0 0.0
    %100 = vmatprep.subr.mxu0 0.0
    %101 = vmatpush1.msra.mxu0 0.0
    %102 = vmatprep.subr.mxu0 0.0
    %103 = vmatpush1.msra.mxu0 0.0
    %104 = vmatprep.subr.mxu0 0.0
    %105 = vmatpush1.msra.mxu0 0.0
    %106 = vmatprep.subr.mxu0 0.0
    %107 = vmatpush1.msra.mxu0 0.0
    %108 = vmatprep.subr.mxu0 0.0
    %109 = vmatpush1.msra.mxu0 0.0
    %110 = vmatprep.subr.mxu0 0.0
    %111 = vmatpush1.msra.mxu0 0.0
    %112 = vmatprep.subr.mxu0 0.0
    %113 = vmatpush1.msra.mxu0 0.0
    %114 = vmatprep.subr.mxu0 0.0
    %115 = vmatpush1.msra.mxu0 0.0
    %116 = vmatprep.subr.mxu0 0.0
    %117 = vmatpush1.msra.mxu0 0.0
    %118 = vmatprep.subr.mxu0 0.0
    %119 = vmatpush1.msra.mxu0 %v61
    %120 = vmatprep.subr.mxu0 0.0
    %121 = vmatpush1.msra.mxu0 %v60
    %122 = vmatprep.subr.mxu0 0.0
    %123 = vmatpush1.msra.mxu0 %v59
    %124 = vmatprep.subr.mxu0 0.0
    %125 = vmatpush1.msra.mxu0 %v58
    %126 = vmatprep.subr.mxu0 0.0
    %127 = vmatpush2.msra.mxu0 0.0
    %128 = vmatprep.subr.mxu0 0.0
    %129 = vmatpush2.msra.mxu0 0.0
    %130 = vmatprep.subr.mxu0 0.0
    %131 = vmatpush2.msra.mxu0 0.0
    %132 = vmatprep.subr.mxu0 0.0
    %133 = vmatpush2.msra.mxu0 0.0
    %134 = vmatprep.subr.mxu0 0.0
    %135 = vmatpush2.msra.mxu0 0.0
    %136 = vmatprep.subr.mxu0 0.0
    %137 = vmatpush2.msra.mxu0 0.0
    %138 = vmatprep.subr.mxu0 0.0
    %139 = vmatpush2.msra.mxu0 0.0
    %140 = vmatprep.subr.mxu0 0.0
    %141 = vmatpush2.msra.mxu0 0.0
    %142 = vmatprep.subr.mxu0 0.0
    %143 = vmatpush2.msra.mxu0 0.0
    %144 = vmatprep.subr.mxu0 0.0
    %145 = vmatpush2.msra.mxu0 0.0
    %146 = vmatprep.subr.mxu0 0.0
    %147 = vmatpush2.msra.mxu0 0.0
    %148 = vmatprep.subr.mxu0 0.0
    %149 = vmatpush2.msra.mxu0 0.0
    %150 = vmatprep.subr.mxu0 0.0
    %151 = vmatpush2.msra.mxu0 0.0
    %152 = vmatprep.subr.mxu0 0.0
    %153 = vmatpush2.msra.mxu0 0.0
    %154 = vmatprep.subr.mxu0 0.0
    %155 = vmatpush2.msra.mxu0 0.0
    %156 = vmatprep.subr.mxu0 0.0
    %157 = vmatpush2.msra.mxu0 0.0
    %158 = vmatprep.mubr.f32.mxu0 0.0
    %159 = vmatmul.mubr.f32.gmra.mxu0 %v71
    %v160 = vpop.f32.mrf.mxu0
    %v161 = vadd.f32 %v67, %v160
    %v162 = vpop.f32.mrf.mxu0
    %163 = vmatprep.mubr.f32.mxu0 0.0
    %164 = vmatmul.mubr.f32.gmra.mxu0 %v74
    %v165 = vpop.f32.mrf.mxu0
    %v166 = vadd.f32 %v67, %v165
    %v167 = vpop.f32.mrf.mxu0
    %168 = vmatprep.mubr.f32.mxu0 0.0
    %169 = vmatmul.mubr.f32.gmra.mxu0 %v77
    %v170 = vpop.f32.mrf.mxu0
    %v171 = vadd.f32 %v67, %v170
    %v172 = vpop.f32.mrf.mxu0
    %173 = vmatprep.mubr.f32.mxu0 0.0
    %174 = vmatmul.mubr.f32.gmra.mxu0 %v80
    %v175 = vpop.f32.mrf.mxu0
    %v176 = vadd.f32 %v67, %v175
    %v177 = vpop.f32.mrf.mxu0
    %178 = vmatprep.mubr.f32.mxu0 0.0
    %179 = vmatmul.mubr.f32.gmra.mxu0 %v83
    %v180 = vpop.f32.mrf.mxu0
    %v181 = vadd.f32 %v67, %v180
    %v182 = vpop.f32.mrf.mxu0
    %183 = vmatprep.mubr.f32.mxu0 0.0
    %184 = vmatmul.mubr.f32.gmra.mxu0 %v86
    %v185 = vpop.f32.mrf.mxu0
    %v186 = vadd.f32 %v67, %v185
    %v187 = vpop.f32.mrf.mxu0
    %188 = vmatprep.mubr.f32.mxu0 0.0
    %189 = vmatmul.mubr.f32.gmra.mxu0 %v89
    %v190 = vpop.f32.mrf.mxu0
    %v191 = vadd.f32 %v67, %v190
    %v192 = vpop.f32.mrf.mxu0
    %193 = vmatprep.mubr.f32.mxu0 0.0
    %194 = vmatmul.mubr.f32.gmra.mxu0 %v92
    %v195 = vpop.f32.mrf.mxu0
    %v196 = vadd.f32 %v67, %v195
    %v197 = vpop.f32.mrf.mxu0
    %198 = vdwg.mxu0
    %199 = vst [vmem:[#allocation2] sm:$0xff] %v161
    %200 = vst [vmem:[#allocation2 + $0x10] sm:$0xff] %v166
    %201 = vst [vmem:[#allocation2 + $0x20] sm:$0xff] %v171
    %202 = vst [vmem:[#allocation2 + $0x30] sm:$0xff] %v176
    %203 = vst [vmem:[#allocation2 + $0x40] sm:$0xff] %v181
    %204 = vst [vmem:[#allocation2 + $0x50] sm:$0xff] %v186
    %205 = vst [vmem:[#allocation2 + $0x60] sm:$0xff] %v191
    %206 = vst [vmem:[#allocation2 + $0x70] sm:$0xff] %v196
    %v207 = vld [vmem:[%s2] sm:$0xff]
    %v208 = vld [vmem:[%s2 + $0x8] sm:$0xff]
    %v209 = vld [vmem:[%s2 + $0x10] sm:$0xff]
    %v210 = vld [vmem:[%s2 + $0x18] sm:$0xff]
    %v211 = vld [vmem:[%s2 + $0x20] sm:$0xff]
    %v212 = vld [vmem:[%s2 + $0x28] sm:$0xff]
    %v213 = vld [vmem:[%s2 + $0x30] sm:$0xff]
    %v214 = vld [vmem:[%s2 + $0x38] sm:$0xff]
    %v215 = vld [vmem:[%s4] sm:$0xff]
    %v216 = vld [vmem:[%s4 + $0x8] sm:$0xff]
    %v217 = vld [vmem:[%s4 + $0x10] sm:$0xff]
    %v218 = vld [vmem:[%s4 + $0x18] sm:$0xff]
    %v219 = vld [vmem:[%s6] sm:$0x1]
    %v221 = vlaneseq
    %v222 = vshrl.u32 %v221, 7
    %v223 = vsub.s32 0, %v222
    %v224 = vrot.slane %v219, %v223
    %v227 = vsel %vm69, %v207, 0
    %v230 = vsel %vm69, %v208, 0
    %v233 = vsel %vm69, %v209, 0
    %v236 = vsel %vm69, %v210, 0
    %v239 = vsel %vm69, %v211, 0
    %v242 = vsel %vm69, %v212, 0
    %v245 = vsel %vm69, %v213, 0
    %v248 = vsel %vm69, %v214, 0
    %250 = vmatprep.subr.mxu0 0.0
    %251 = vmatpush1.msra.mxu0 0.0
    %252 = vmatprep.subr.mxu0 0.0
    %253 = vmatpush1.msra.mxu0 0.0
    %254 = vmatprep.subr.mxu0 0.0
    %255 = vmatpush1.msra.mxu0 0.0
    %256 = vmatprep.subr.mxu0 0.0
    %257 = vmatpush1.msra.mxu0 0.0
    %258 = vmatprep.subr.mxu0 0.0
    %259 = vmatpush1.msra.mxu0 0.0
    %260 = vmatprep.subr.mxu0 0.0
    %261 = vmatpush1.msra.mxu0 0.0
    %262 = vmatprep.subr.mxu0 0.0
    %263 = vmatpush1.msra.mxu0 0.0
    %264 = vmatprep.subr.mxu0 0.0
    %265 = vmatpush1.msra.mxu0 0.0
    %266 = vmatprep.subr.mxu0 0.0
    %267 = vmatpush1.msra.mxu0 0.0
    %268 = vmatprep.subr.mxu0 0.0
    %269 = vmatpush1.msra.mxu0 0.0
    %270 = vmatprep.subr.mxu0 0.0
    %271 = vmatpush1.msra.mxu0 0.0
    %272 = vmatprep.subr.mxu0 0.0
    %273 = vmatpush1.msra.mxu0 0.0
    %274 = vmatprep.subr.mxu0 0.0
    %275 = vmatpush1.msra.mxu0 %v218
    %276 = vmatprep.subr.mxu0 0.0
    %277 = vmatpush1.msra.mxu0 %v217
    %278 = vmatprep.subr.mxu0 0.0
    %279 = vmatpush1.msra.mxu0 %v216
    %280 = vmatprep.subr.mxu0 0.0
    %281 = vmatpush1.msra.mxu0 %v215
    %282 = vmatprep.subr.mxu0 0.0
    %283 = vmatpush2.msra.mxu0 0.0
    %284 = vmatprep.subr.mxu0 0.0
    %285 = vmatpush2.msra.mxu0 0.0
    %286 = vmatprep.subr.mxu0 0.0
    %287 = vmatpush2.msra.mxu0 0.0
    %288 = vmatprep.subr.mxu0 0.0
    %289 = vmatpush2.msra.mxu0 0.0
    %290 = vmatprep.subr.mxu0 0.0
    %291 = vmatpush2.msra.mxu0 0.0
    %292 = vmatprep.subr.mxu0 0.0
    %293 = vmatpush2.msra.mxu0 0.0
    %294 = vmatprep.subr.mxu0 0.0
    %295 = vmatpush2.msra.mxu0 0.0
    %296 = vmatprep.subr.mxu0 0.0
    %297 = vmatpush2.msra.mxu0 0.0
    %298 = vmatprep.subr.mxu0 0.0
    %299 = vmatpush2.msra.mxu0 0.0
    %300 = vmatprep.subr.mxu0 0.0
    %301 = vmatpush2.msra.mxu0 0.0
    %302 = vmatprep.subr.mxu0 0.0
    %303 = vmatpush2.msra.mxu0 0.0
    %304 = vmatprep.subr.mxu0 0.0
    %305 = vmatpush2.msra.mxu0 0.0
    %306 = vmatprep.subr.mxu0 0.0
    %307 = vmatpush2.msra.mxu0 0.0
    %308 = vmatprep.subr.mxu0 0.0
    %309 = vmatpush2.msra.mxu0 0.0
    %310 = vmatprep.subr.mxu0 0.0
    %311 = vmatpush2.msra.mxu0 0.0
    %312 = vmatprep.subr.mxu0 0.0
    %313 = vmatpush2.msra.mxu0 0.0
    %314 = vmatprep.mubr.f32.mxu0 0.0
    %315 = vmatmul.mubr.f32.gmra.mxu0 %v227
    %v316 = vpop.f32.mrf.mxu0
    %v317 = vadd.f32 %v224, %v316
    %v318 = vpop.f32.mrf.mxu0
    %319 = vmatprep.mubr.f32.mxu0 0.0
    %320 = vmatmul.mubr.f32.gmra.mxu0 %v230
    %v321 = vpop.f32.mrf.mxu0
    %v322 = vadd.f32 %v224, %v321
    %v323 = vpop.f32.mrf.mxu0
    %324 = vmatprep.mubr.f32.mxu0 0.0
    %325 = vmatmul.mubr.f32.gmra.mxu0 %v233
    %v326 = vpop.f32.mrf.mxu0
    %v327 = vadd.f32 %v224, %v326
    %v328 = vpop.f32.mrf.mxu0
    %329 = vmatprep.mubr.f32.mxu0 0.0
    %330 = vmatmul.mubr.f32.gmra.mxu0 %v236
    %v331 = vpop.f32.mrf.mxu0
    %v332 = vadd.f32 %v224, %v331
    %v333 = vpop.f32.mrf.mxu0
    %334 = vmatprep.mubr.f32.mxu0 0.0
    %335 = vmatmul.mubr.f32.gmra.mxu0 %v239
    %v336 = vpop.f32.mrf.mxu0
    %v337 = vadd.f32 %v224, %v336
    %v338 = vpop.f32.mrf.mxu0
    %339 = vmatprep.mubr.f32.mxu0 0.0
    %340 = vmatmul.mubr.f32.gmra.mxu0 %v242
    %v341 = vpop.f32.mrf.mxu0
    %v342 = vadd.f32 %v224, %v341
    %v343 = vpop.f32.mrf.mxu0
    %344 = vmatprep.mubr.f32.mxu0 0.0
    %345 = vmatmul.mubr.f32.gmra.mxu0 %v245
    %v346 = vpop.f32.mrf.mxu0
    %v347 = vadd.f32 %v224, %v346
    %v348 = vpop.f32.mrf.mxu0
    %349 = vmatprep.mubr.f32.mxu0 0.0
    %350 = vmatmul.mubr.f32.gmra.mxu0 %v248
    %v351 = vpop.f32.mrf.mxu0
    %v352 = vadd.f32 %v224, %v351
    %v353 = vpop.f32.mrf.mxu0
    %354 = vdwg.mxu0
    %355 = vst [vmem:[#allocation2 + $0x8] sm:$0xff] %v317
    %356 = vst [vmem:[#allocation2 + $0x18] sm:$0xff] %v322
    %357 = vst [vmem:[#allocation2 + $0x28] sm:$0xff] %v327
    %358 = vst [vmem:[#allocation2 + $0x38] sm:$0xff] %v332
    %359 = vst [vmem:[#allocation2 + $0x48] sm:$0xff] %v337
    %360 = vst [vmem:[#allocation2 + $0x58] sm:$0xff] %v342
    %361 = vst [vmem:[#allocation2 + $0x68] sm:$0xff] %v347
    %362 = vst [vmem:[#allocation2 + $0x78] sm:$0xff] %v352
    %v363 = vld [vmem:[#allocation3] sm:$0xff]
    %v364 = vld [vmem:[#allocation3 + $0x8] sm:$0xff]
    %v365 = vld [vmem:[#allocation3 + $0x10] sm:$0xff]
    %v366 = vld [vmem:[#allocation3 + $0x18] sm:$0xff]
    %v367 = vld [vmem:[#allocation3 + $0x20] sm:$0xff]
    %v368 = vld [vmem:[#allocation3 + $0x28] sm:$0xff]
    %v369 = vld [vmem:[#allocation3 + $0x30] sm:$0xff]
    %v370 = vld [vmem:[#allocation3 + $0x38] sm:$0xff]
    %v371 = vld [vmem:[#allocation3 + $0x40] sm:$0xff]
    %v372 = vld [vmem:[#allocation3 + $0x48] sm:$0xff]
    %v373 = vld [vmem:[#allocation3 + $0x50] sm:$0xff]
    %v374 = vld [vmem:[#allocation3 + $0x58] sm:$0xff]
    %v375 = vld [vmem:[#allocation3 + $0x60] sm:$0xff]
    %v376 = vld [vmem:[#allocation3 + $0x68] sm:$0xff]
    %v377 = vld [vmem:[#allocation3 + $0x70] sm:$0xff]
    %v378 = vld [vmem:[#allocation3 + $0x78] sm:$0xff]
    %v379 = vld [vmem:[#allocation3 + $0x80] sm:$0xff]
    %v380 = vld [vmem:[#allocation3 + $0x88] sm:$0xff]
    %v381 = vld [vmem:[#allocation3 + $0x90] sm:$0xff]
    %v382 = vld [vmem:[#allocation3 + $0x98] sm:$0xff]
    %v383 = vld [vmem:[#allocation3 + $0xa0] sm:$0xff]
    %v384 = vld [vmem:[#allocation3 + $0xa8] sm:$0xff]
    %v385 = vld [vmem:[#allocation3 + $0xb0] sm:$0xff]
    %v386 = vld [vmem:[#allocation3 + $0xb8] sm:$0xff]
    %v387 = vld [vmem:[#allocation3 + $0xc0] sm:$0xff]
    %v388 = vld [vmem:[#allocation3 + $0xc8] sm:$0xff]
    %v389 = vld [vmem:[#allocation3 + $0xd0] sm:$0xff]
    %v390 = vld [vmem:[#allocation3 + $0xd8] sm:$0xff]
    %v391 = vld [vmem:[#allocation3 + $0xe0] sm:$0xff]
    %v392 = vld [vmem:[#allocation3 + $0xe8] sm:$0xff]
    %v393 = vld [vmem:[#allocation3 + $0xf0] sm:$0xff]
    %v394 = vld [vmem:[#allocation3 + $0xf8] sm:$0xff]
    %v395 = vld [vmem:[#allocation3 + $0x100] sm:$0xff]
    %v396 = vld [vmem:[#allocation3 + $0x108] sm:$0xff]
    %v397 = vld [vmem:[#allocation3 + $0x110] sm:$0xff]
    %v398 = vld [vmem:[#allocation3 + $0x118] sm:$0xff]
    %v399 = vld [vmem:[#allocation3 + $0x120] sm:$0xff]
    %v400 = vld [vmem:[#allocation3 + $0x128] sm:$0xff]
    %v401 = vld [vmem:[#allocation3 + $0x130] sm:$0xff]
    %v402 = vld [vmem:[#allocation3 + $0x138] sm:$0xff]
    %v403 = vld [vmem:[#allocation3 + $0x140] sm:$0xff]
    %v404 = vld [vmem:[#allocation3 + $0x148] sm:$0xff]
    %v405 = vld [vmem:[#allocation3 + $0x150] sm:$0xff]
    %v406 = vld [vmem:[#allocation3 + $0x158] sm:$0xff]
    %v407 = vld [vmem:[#allocation3 + $0x160] sm:$0xff]
    %v408 = vld [vmem:[#allocation3 + $0x168] sm:$0xff]
    %v409 = vld [vmem:[#allocation3 + $0x170] sm:$0xff]
    %v410 = vld [vmem:[#allocation3 + $0x178] sm:$0xff]
    %v411 = vld [vmem:[#allocation3 + $0x180] sm:$0xff]
    %v412 = vld [vmem:[#allocation3 + $0x188] sm:$0xff]
    %v413 = vld [vmem:[#allocation3 + $0x190] sm:$0xff]
    %v414 = vld [vmem:[#allocation3 + $0x198] sm:$0xff]
    %v415 = vld [vmem:[#allocation3 + $0x1a0] sm:$0xff]
    %v416 = vld [vmem:[#allocation3 + $0x1a8] sm:$0xff]
    %v417 = vld [vmem:[#allocation3 + $0x1b0] sm:$0xff]
    %v418 = vld [vmem:[#allocation3 + $0x1b8] sm:$0xff]
    %v419 = vld [vmem:[#allocation3 + $0x1c0] sm:$0xff]
    %v420 = vld [vmem:[#allocation3 + $0x1c8] sm:$0xff]
    %v421 = vld [vmem:[#allocation3 + $0x1d0] sm:$0xff]
    %v422 = vld [vmem:[#allocation3 + $0x1d8] sm:$0xff]
    %v423 = vld [vmem:[#allocation3 + $0x1e0] sm:$0xff]
    %v424 = vld [vmem:[#allocation3 + $0x1e8] sm:$0xff]
    %v425 = vld [vmem:[#allocation3 + $0x1f0] sm:$0xff]
    %v426 = vld [vmem:[#allocation3 + $0x1f8] sm:$0xff]
    %v427 = vld [vmem:[%s0] sm:$0xff]
    %v428 = vlaneseq
    %v429 = vand.u32 %v428, 127
    %v430 = vadd.s32 %v429, 128
    %vm431 = vcmp.lt.s32.totalorder %v429, 128
    %vm432 = vcmp.lt.s32.totalorder %v430, 128
    %v433 = vsel %vm431, 1, 4294967295
    %v434 = vsel %vm432, 1, 4294967295
    %s435 = smul.u32 0, 8
    %s436 = ssub.s32 7, %s435
    %v437 = vstv %s435
    %v438 = vstv %s436
    %v439 = vsel %vm431, %v437, %v438
    %v440 = vsel %vm432, %v437, %v438
    %v441 = vld [vmem:[#allocation6] sm:$0xff]
    %v442 = vld [vmem:[#allocation6 + $0x8] sm:$0xff]
    %v443 = vld [vmem:[#allocation2] sm:$0xff]
    %v444 = vld [vmem:[#allocation2 + $0x8] sm:$0xff]
    %445 = vmatprep.subr.mxu0 %v394
    %446 = vmatpush1.msra.mxu0 %v393
    %447 = vmatprep.subr.mxu0 %v392
    %448 = vmatpush1.msra.mxu0 %v391
    %449 = vmatprep.subr.mxu0 %v390
    %450 = vmatpush1.msra.mxu0 %v389
    %451 = vmatprep.subr.mxu0 %v388
    %452 = vmatpush1.msra.mxu0 %v387
    %453 = vmatprep.subr.mxu0 %v386
    %454 = vmatpush1.msra.mxu0 %v385
    %455 = vmatprep.subr.mxu0 %v384
    %456 = vmatpush1.msra.mxu0 %v383
    %457 = vmatprep.subr.mxu0 %v382
    %458 = vmatpush1.msra.mxu0 %v381
    %459 = vmatprep.subr.mxu0 %v380
    %460 = vmatpush1.msra.mxu0 %v379
    %461 = vmatprep.subr.mxu0 %v378
    %462 = vmatpush1.msra.mxu0 %v377
    %463 = vmatprep.subr.mxu0 %v376
    %464 = vmatpush1.msra.mxu0 %v375
    %465 = vmatprep.subr.mxu0 %v374
    %466 = vmatpush1.msra.mxu0 %v373
    %467 = vmatprep.subr.mxu0 %v372
    %468 = vmatpush1.msra.mxu0 %v371
    %469 = vmatprep.subr.mxu0 %v370
    %470 = vmatpush1.msra.mxu0 %v369
    %471 = vmatprep.subr.mxu0 %v368
    %472 = vmatpush1.msra.mxu0 %v367
    %473 = vmatprep.subr.mxu0 %v366
    %474 = vmatpush1.msra.mxu0 %v365
    %475 = vmatprep.subr.mxu0 %v364
    %476 = vmatpush1.msra.mxu0 %v363
    %477 = vmatprep.subr.mxu0 %v426
    %478 = vmatpush2.msra.mxu0 %v425
    %479 = vmatprep.subr.mxu0 %v424
    %480 = vmatpush2.msra.mxu0 %v423
    %481 = vmatprep.subr.mxu0 %v422
    %482 = vmatpush2.msra.mxu0 %v421
    %483 = vmatprep.subr.mxu0 %v420
    %484 = vmatpush2.msra.mxu0 %v419
    %485 = vmatprep.subr.mxu0 %v418
    %486 = vmatpush2.msra.mxu0 %v417
    %487 = vmatprep.subr.mxu0 %v416
    %488 = vmatpush2.msra.mxu0 %v415
    %489 = vmatprep.subr.mxu0 %v414
    %490 = vmatpush2.msra.mxu0 %v413
    %491 = vmatprep.subr.mxu0 %v412
    %492 = vmatpush2.msra.mxu0 %v411
    %493 = vmatprep.subr.mxu0 %v410
    %494 = vmatpush2.msra.mxu0 %v409
    %495 = vmatprep.subr.mxu0 %v408
    %496 = vmatpush2.msra.mxu0 %v407
    %497 = vmatprep.subr.mxu0 %v406
    %498 = vmatpush2.msra.mxu0 %v405
    %499 = vmatprep.subr.mxu0 %v404
    %500 = vmatpush2.msra.mxu0 %v403
    %501 = vmatprep.subr.mxu0 %v402
    %502 = vmatpush2.msra.mxu0 %v401
    %503 = vmatprep.subr.mxu0 %v400
    %504 = vmatpush2.msra.mxu0 %v399
    %505 = vmatprep.subr.mxu0 %v398
    %506 = vmatpush2.msra.mxu0 %v397
    %507 = vmatprep.subr.mxu0 %v396
    %508 = vmatpush2.msra.mxu0 %v395
    %509 = vmatprep.mubr.f32.mxu0 %v442
    %510 = vmatmul.mubr.f32.gmra.mxu0 %v441
    %v511 = vpop.f32.mrf.mxu0
    %v512 = vadd.f32 %v443, %v511
    %v513 = vpop.f32.mrf.mxu0
    %v514 = vadd.f32 %v444, %v513
    %515 = vdwg.mxu0
    %v516 = vtanh.pop %v512
    %v517 = vtanh.pop %v514
    %518 = vset.pattern.permute.xlu0 0
    %519 = vperm.xlu0 %518, %v427
    %v520 = vpop.permute.xlu0 %519
    %vm521 = vcmp.lt.s32.totalorder %v439, %v520
    %vm522 = vcmp.lt.s32.totalorder %v440, %v520
    %v523 = vsel %vm521, %v516, %v441
    %v524 = vsel %vm522, %v517, %v442
    %v525 = vadd.s32 %v439, %v433
    %v526 = vadd.s32 %v440, %v434
    %v527 = vld [vmem:[#allocation2 + $0x10] sm:$0xff]
    %v528 = vld [vmem:[#allocation2 + $0x18] sm:$0xff]
    %529 = vmatprep.subr.mxu0 %v394
    %530 = vmatpush1.msra.mxu0 %v393
    %531 = vmatprep.subr.mxu0 %v392
    %532 = vmatpush1.msra.mxu0 %v391
    %533 = vmatprep.subr.mxu0 %v390
    %534 = vmatpush1.msra.mxu0 %v389
    %535 = vmatprep.subr.mxu0 %v388
    %536 = vmatpush1.msra.mxu0 %v387
    %537 = vmatprep.subr.mxu0 %v386
    %538 = vmatpush1.msra.mxu0 %v385
    %539 = vmatprep.subr.mxu0 %v384
    %540 = vmatpush1.msra.mxu0 %v383
    %541 = vmatprep.subr.mxu0 %v382
    %542 = vmatpush1.msra.mxu0 %v381
    %543 = vmatprep.subr.mxu0 %v380
    %544 = vmatpush1.msra.mxu0 %v379
    %545 = vmatprep.subr.mxu0 %v378
    %546 = vmatpush1.msra.mxu0 %v377
    %547 = vmatprep.subr.mxu0 %v376
    %548 = vmatpush1.msra.mxu0 %v375
    %549 = vmatprep.subr.mxu0 %v374
    %550 = vmatpush1.msra.mxu0 %v373
    %551 = vmatprep.subr.mxu0 %v372
    %552 = vmatpush1.msra.mxu0 %v371
    %553 = vmatprep.subr.mxu0 %v370
    %554 = vmatpush1.msra.mxu0 %v369
    %555 = vmatprep.subr.mxu0 %v368
    %556 = vmatpush1.msra.mxu0 %v367
    %557 = vmatprep.subr.mxu0 %v366
    %558 = vmatpush1.msra.mxu0 %v365
    %559 = vmatprep.subr.mxu0 %v364
    %560 = vmatpush1.msra.mxu0 %v363
    %561 = vmatprep.subr.mxu0 %v426
    %562 = vmatpush2.msra.mxu0 %v425
    %563 = vmatprep.subr.mxu0 %v424
    %564 = vmatpush2.msra.mxu0 %v423
    %565 = vmatprep.subr.mxu0 %v422
    %566 = vmatpush2.msra.mxu0 %v421
    %567 = vmatprep.subr.mxu0 %v420
    %568 = vmatpush2.msra.mxu0 %v419
    %569 = vmatprep.subr.mxu0 %v418
    %570 = vmatpush2.msra.mxu0 %v417
    %571 = vmatprep.subr.mxu0 %v416
    %572 = vmatpush2.msra.mxu0 %v415
    %573 = vmatprep.subr.mxu0 %v414
    %574 = vmatpush2.msra.mxu0 %v413
    %575 = vmatprep.subr.mxu0 %v412
    %576 = vmatpush2.msra.mxu0 %v411
    %577 = vmatprep.subr.mxu0 %v410
    %578 = vmatpush2.msra.mxu0 %v409
    %579 = vmatprep.subr.mxu0 %v408
    %580 = vmatpush2.msra.mxu0 %v407
    %581 = vmatprep.subr.mxu0 %v406
    %582 = vmatpush2.msra.mxu0 %v405
    %583 = vmatprep.subr.mxu0 %v404
    %584 = vmatpush2.msra.mxu0 %v403
    %585 = vmatprep.subr.mxu0 %v402
    %586 = vmatpush2.msra.mxu0 %v401
    %587 = vmatprep.subr.mxu0 %v400
    %588 = vmatpush2.msra.mxu0 %v399
    %589 = vmatprep.subr.mxu0 %v398
    %590 = vmatpush2.msra.mxu0 %v397
    %591 = vmatprep.subr.mxu0 %v396
    %592 = vmatpush2.msra.mxu0 %v395
    %593 = vmatprep.mubr.f32.mxu0 %v524
    %594 = vmatmul.mubr.f32.gmra.mxu0 %v523
    %v595 = vpop.f32.mrf.mxu0
    %v596 = vadd.f32 %v527, %v595
    %v597 = vpop.f32.mrf.mxu0
    %v598 = vadd.f32 %v528, %v597
    %599 = vdwg.mxu0
    %v600 = vtanh.pop %v596
    %v601 = vtanh.pop %v598
    %vm602 = vcmp.lt.s32.totalorder %v525, %v520
    %vm603 = vcmp.lt.s32.totalorder %v526, %v520
    %v604 = vsel %vm602, %v600, %v523
    %v605 = vsel %vm603, %v601, %v524
    %v606 = vadd.s32 %v525, %v433
    %v607 = vadd.s32 %v526, %v434
    %v608 = vld [vmem:[#allocation2 + $0x20] sm:$0xff]
    %v609 = vld [vmem:[#allocation2 + $0x28] sm:$0xff]
    %610 = vmatprep.subr.mxu0 %v394
    %611 = vmatpush1.msra.mxu0 %v393
    %612 = vmatprep.subr.mxu0 %v392
    %613 = vmatpush1.msra.mxu0 %v391
    %614 = vmatprep.subr.mxu0 %v390
    %615 = vmatpush1.msra.mxu0 %v389
    %616 = vmatprep.subr.mxu0 %v388
    %617 = vmatpush1.msra.mxu0 %v387
    %618 = vmatprep.subr.mxu0 %v386
    %619 = vmatpush1.msra.mxu0 %v385
    %620 = vmatprep.subr.mxu0 %v384
    %621 = vmatpush1.msra.mxu0 %v383
    %622 = vmatprep.subr.mxu0 %v382
    %623 = vmatpush1.msra.mxu0 %v381
    %624 = vmatprep.subr.mxu0 %v380
    %625 = vmatpush1.msra.mxu0 %v379
    %626 = vmatprep.subr.mxu0 %v378
    %627 = vmatpush1.msra.mxu0 %v377
    %628 = vmatprep.subr.mxu0 %v376
    %629 = vmatpush1.msra.mxu0 %v375
    %630 = vmatprep.subr.mxu0 %v374
    %631 = vmatpush1.msra.mxu0 %v373
    %632 = vmatprep.subr.mxu0 %v372
    %633 = vmatpush1.msra.mxu0 %v371
    %634 = vmatprep.subr.mxu0 %v370
    %635 = vmatpush1.msra.mxu0 %v369
    %636 = vmatprep.subr.mxu0 %v368
    %637 = vmatpush1.msra.mxu0 %v367
    %638 = vmatprep.subr.mxu0 %v366
    %639 = vmatpush1.msra.mxu0 %v365
    %640 = vmatprep.subr.mxu0 %v364
    %641 = vmatpush1.msra.mxu0 %v363
    %642 = vmatprep.subr.mxu0 %v426
    %643 = vmatpush2.msra.mxu0 %v425
    %644 = vmatprep.subr.mxu0 %v424
    %645 = vmatpush2.msra.mxu0 %v423
    %646 = vmatprep.subr.mxu0 %v422
    %647 = vmatpush2.msra.mxu0 %v421
    %648 = vmatprep.subr.mxu0 %v420
    %649 = vmatpush2.msra.mxu0 %v419
    %650 = vmatprep.subr.mxu0 %v418
    %651 = vmatpush2.msra.mxu0 %v417
    %652 = vmatprep.subr.mxu0 %v416
    %653 = vmatpush2.msra.mxu0 %v415
    %654 = vmatprep.subr.mxu0 %v414
    %655 = vmatpush2.msra.mxu0 %v413
    %656 = vmatprep.subr.mxu0 %v412
    %657 = vmatpush2.msra.mxu0 %v411
    %658 = vmatprep.subr.mxu0 %v410
    %659 = vmatpush2.msra.mxu0 %v409
    %660 = vmatprep.subr.mxu0 %v408
    %661 = vmatpush2.msra.mxu0 %v407
    %662 = vmatprep.subr.mxu0 %v406
    %663 = vmatpush2.msra.mxu0 %v405
    %664 = vmatprep.subr.mxu0 %v404
    %665 = vmatpush2.msra.mxu0 %v403
    %666 = vmatprep.subr.mxu0 %v402
    %667 = vmatpush2.msra.mxu0 %v401
    %668 = vmatprep.subr.mxu0 %v400
    %669 = vmatpush2.msra.mxu0 %v399
    %670 = vmatprep.subr.mxu0 %v398
    %671 = vmatpush2.msra.mxu0 %v397
    %672 = vmatprep.subr.mxu0 %v396
    %673 = vmatpush2.msra.mxu0 %v395
    %674 = vmatprep.mubr.f32.mxu0 %v605
    %675 = vmatmul.mubr.f32.gmra.mxu0 %v604
    %v676 = vpop.f32.mrf.mxu0
    %v677 = vadd.f32 %v608, %v676
    %v678 = vpop.f32.mrf.mxu0
    %v679 = vadd.f32 %v609, %v678
    %680 = vdwg.mxu0
    %v681 = vtanh.pop %v677
    %v682 = vtanh.pop %v679
    %vm683 = vcmp.lt.s32.totalorder %v606, %v520
    %vm684 = vcmp.lt.s32.totalorder %v607, %v520
    %v685 = vsel %vm683, %v681, %v604
    %v686 = vsel %vm684, %v682, %v605
    %v687 = vadd.s32 %v606, %v433
    %v688 = vadd.s32 %v607, %v434
    %v689 = vld [vmem:[#allocation2 + $0x30] sm:$0xff]
    %v690 = vld [vmem:[#allocation2 + $0x38] sm:$0xff]
    %691 = vmatprep.subr.mxu0 %v394
    %692 = vmatpush1.msra.mxu0 %v393
    %693 = vmatprep.subr.mxu0 %v392
    %694 = vmatpush1.msra.mxu0 %v391
    %695 = vmatprep.subr.mxu0 %v390
    %696 = vmatpush1.msra.mxu0 %v389
    %697 = vmatprep.subr.mxu0 %v388
    %698 = vmatpush1.msra.mxu0 %v387
    %699 = vmatprep.subr.mxu0 %v386
    %700 = vmatpush1.msra.mxu0 %v385
    %701 = vmatprep.subr.mxu0 %v384
    %702 = vmatpush1.msra.mxu0 %v383
    %703 = vmatprep.subr.mxu0 %v382
    %704 = vmatpush1.msra.mxu0 %v381
    %705 = vmatprep.subr.mxu0 %v380
    %706 = vmatpush1.msra.mxu0 %v379
    %707 = vmatprep.subr.mxu0 %v378
    %708 = vmatpush1.msra.mxu0 %v377
    %709 = vmatprep.subr.mxu0 %v376
    %710 = vmatpush1.msra.mxu0 %v375
    %711 = vmatprep.subr.mxu0 %v374
    %712 = vmatpush1.msra.mxu0 %v373
    %713 = vmatprep.subr.mxu0 %v372
    %714 = vmatpush1.msra.mxu0 %v371
    %715 = vmatprep.subr.mxu0 %v370
    %716 = vmatpush1.msra.mxu0 %v369
    %717 = vmatprep.subr.mxu0 %v368
    %718 = vmatpush1.msra.mxu0 %v367
    %719 = vmatprep.subr.mxu0 %v366
    %720 = vmatpush1.msra.mxu0 %v365
    %721 = vmatprep.subr.mxu0 %v364
    %722 = vmatpush1.msra.mxu0 %v363
    %723 = vmatprep.subr.mxu0 %v426
    %724 = vmatpush2.msra.mxu0 %v425
    %725 = vmatprep.subr.mxu0 %v424
    %726 = vmatpush2.msra.mxu0 %v423
    %727 = vmatprep.subr.mxu0 %v422
    %728 = vmatpush2.msra.mxu0 %v421
    %729 = vmatprep.subr.mxu0 %v420
    %730 = vmatpush2.msra.mxu0 %v419
    %731 = vmatprep.subr.mxu0 %v418
    %732 = vmatpush2.msra.mxu0 %v417
    %733 = vmatprep.subr.mxu0 %v416
    %734 = vmatpush2.msra.mxu0 %v415
    %735 = vmatprep.subr.mxu0 %v414
    %736 = vmatpush2.msra.mxu0 %v413
    %737 = vmatprep.subr.mxu0 %v412
    %738 = vmatpush2.msra.mxu0 %v411
    %739 = vmatprep.subr.mxu0 %v410
    %740 = vmatpush2.msra.mxu0 %v409
    %741 = vmatprep.subr.mxu0 %v408
    %742 = vmatpush2.msra.mxu0 %v407
    %743 = vmatprep.subr.mxu0 %v406
    %744 = vmatpush2.msra.mxu0 %v405
    %745 = vmatprep.subr.mxu0 %v404
    %746 = vmatpush2.msra.mxu0 %v403
    %747 = vmatprep.subr.mxu0 %v402
    %748 = vmatpush2.msra.mxu0 %v401
    %749 = vmatprep.subr.mxu0 %v400
    %750 = vmatpush2.msra.mxu0 %v399
    %751 = vmatprep.subr.mxu0 %v398
    %752 = vmatpush2.msra.mxu0 %v397
    %753 = vmatprep.subr.mxu0 %v396
    %754 = vmatpush2.msra.mxu0 %v395
    %755 = vmatprep.mubr.f32.mxu0 %v686
    %756 = vmatmul.mubr.f32.gmra.mxu0 %v685
    %v757 = vpop.f32.mrf.mxu0
    %v758 = vadd.f32 %v689, %v757
    %v759 = vpop.f32.mrf.mxu0
    %v760 = vadd.f32 %v690, %v759
    %761 = vdwg.mxu0
    %v762 = vtanh.pop %v758
    %v763 = vtanh.pop %v760
    %vm764 = vcmp.lt.s32.totalorder %v687, %v520
    %vm765 = vcmp.lt.s32.totalorder %v688, %v520
    %v766 = vsel %vm764, %v762, %v685
    %v767 = vsel %vm765, %v763, %v686
    %v768 = vadd.s32 %v687, %v433
    %v769 = vadd.s32 %v688, %v434
    %v770 = vld [vmem:[#allocation2 + $0x40] sm:$0xff]
    %v771 = vld [vmem:[#allocation2 + $0x48] sm:$0xff]
    %772 = vmatprep.subr.mxu0 %v394
    %773 = vmatpush1.msra.mxu0 %v393
    %774 = vmatprep.subr.mxu0 %v392
    %775 = vmatpush1.msra.mxu0 %v391
    %776 = vmatprep.subr.mxu0 %v390
    %777 = vmatpush1.msra.mxu0 %v389
    %778 = vmatprep.subr.mxu0 %v388
    %779 = vmatpush1.msra.mxu0 %v387
    %780 = vmatprep.subr.mxu0 %v386
    %781 = vmatpush1.msra.mxu0 %v385
    %782 = vmatprep.subr.mxu0 %v384
    %783 = vmatpush1.msra.mxu0 %v383
    %784 = vmatprep.subr.mxu0 %v382
    %785 = vmatpush1.msra.mxu0 %v381
    %786 = vmatprep.subr.mxu0 %v380
    %787 = vmatpush1.msra.mxu0 %v379
    %788 = vmatprep.subr.mxu0 %v378
    %789 = vmatpush1.msra.mxu0 %v377
    %790 = vmatprep.subr.mxu0 %v376
    %791 = vmatpush1.msra.mxu0 %v375
    %792 = vmatprep.subr.mxu0 %v374
    %793 = vmatpush1.msra.mxu0 %v373
    %794 = vmatprep.subr.mxu0 %v372
    %795 = vmatpush1.msra.mxu0 %v371
    %796 = vmatprep.subr.mxu0 %v370
    %797 = vmatpush1.msra.mxu0 %v369
    %798 = vmatprep.subr.mxu0 %v368
    %799 = vmatpush1.msra.mxu0 %v367
    %800 = vmatprep.subr.mxu0 %v366
    %801 = vmatpush1.msra.mxu0 %v365
    %802 = vmatprep.subr.mxu0 %v364
    %803 = vmatpush1.msra.mxu0 %v363
    %804 = vmatprep.subr.mxu0 %v426
    %805 = vmatpush2.msra.mxu0 %v425
    %806 = vmatprep.subr.mxu0 %v424
    %807 = vmatpush2.msra.mxu0 %v423
    %808 = vmatprep.subr.mxu0 %v422
    %809 = vmatpush2.msra.mxu0 %v421
    %810 = vmatprep.subr.mxu0 %v420
    %811 = vmatpush2.msra.mxu0 %v419
    %812 = vmatprep.subr.mxu0 %v418
    %813 = vmatpush2.msra.mxu0 %v417
    %814 = vmatprep.subr.mxu0 %v416
    %815 = vmatpush2.msra.mxu0 %v415
    %816 = vmatprep.subr.mxu0 %v414
    %817 = vmatpush2.msra.mxu0 %v413
    %818 = vmatprep.subr.mxu0 %v412
    %819 = vmatpush2.msra.mxu0 %v411
    %820 = vmatprep.subr.mxu0 %v410
    %821 = vmatpush2.msra.mxu0 %v409
    %822 = vmatprep.subr.mxu0 %v408
    %823 = vmatpush2.msra.mxu0 %v407
    %824 = vmatprep.subr.mxu0 %v406
    %825 = vmatpush2.msra.mxu0 %v405
    %826 = vmatprep.subr.mxu0 %v404
    %827 = vmatpush2.msra.mxu0 %v403
    %828 = vmatprep.subr.mxu0 %v402
    %829 = vmatpush2.msra.mxu0 %v401
    %830 = vmatprep.subr.mxu0 %v400
    %831 = vmatpush2.msra.mxu0 %v399
    %832 = vmatprep.subr.mxu0 %v398
    %833 = vmatpush2.msra.mxu0 %v397
    %834 = vmatprep.subr.mxu0 %v396
    %835 = vmatpush2.msra.mxu0 %v395
    %836 = vmatprep.mubr.f32.mxu0 %v767
    %837 = vmatmul.mubr.f32.gmra.mxu0 %v766
    %v838 = vpop.f32.mrf.mxu0
    %v839 = vadd.f32 %v770, %v838
    %v840 = vpop.f32.mrf.mxu0
    %v841 = vadd.f32 %v771, %v840
    %842 = vdwg.mxu0
    %v843 = vtanh.pop %v839
    %v844 = vtanh.pop %v841
    %vm845 = vcmp.lt.s32.totalorder %v768, %v520
    %vm846 = vcmp.lt.s32.totalorder %v769, %v520
    %v847 = vsel %vm845, %v843, %v766
    %v848 = vsel %vm846, %v844, %v767
    %v849 = vadd.s32 %v768, %v433
    %v850 = vadd.s32 %v769, %v434
    %v851 = vld [vmem:[#allocation2 + $0x50] sm:$0xff]
    %v852 = vld [vmem:[#allocation2 + $0x58] sm:$0xff]
    %853 = vmatprep.subr.mxu0 %v394
    %854 = vmatpush1.msra.mxu0 %v393
    %855 = vmatprep.subr.mxu0 %v392
    %856 = vmatpush1.msra.mxu0 %v391
    %857 = vmatprep.subr.mxu0 %v390
    %858 = vmatpush1.msra.mxu0 %v389
    %859 = vmatprep.subr.mxu0 %v388
    %860 = vmatpush1.msra.mxu0 %v387
    %861 = vmatprep.subr.mxu0 %v386
    %862 = vmatpush1.msra.mxu0 %v385
    %863 = vmatprep.subr.mxu0 %v384
    %864 = vmatpush1.msra.mxu0 %v383
    %865 = vmatprep.subr.mxu0 %v382
    %866 = vmatpush1.msra.mxu0 %v381
    %867 = vmatprep.subr.mxu0 %v380
    %868 = vmatpush1.msra.mxu0 %v379
    %869 = vmatprep.subr.mxu0 %v378
    %870 = vmatpush1.msra.mxu0 %v377
    %871 = vmatprep.subr.mxu0 %v376
    %872 = vmatpush1.msra.mxu0 %v375
    %873 = vmatprep.subr.mxu0 %v374
    %874 = vmatpush1.msra.mxu0 %v373
    %875 = vmatprep.subr.mxu0 %v372
    %876 = vmatpush1.msra.mxu0 %v371
    %877 = vmatprep.subr.mxu0 %v370
    %878 = vmatpush1.msra.mxu0 %v369
    %879 = vmatprep.subr.mxu0 %v368
    %880 = vmatpush1.msra.mxu0 %v367
    %881 = vmatprep.subr.mxu0 %v366
    %882 = vmatpush1.msra.mxu0 %v365
    %883 = vmatprep.subr.mxu0 %v364
    %884 = vmatpush1.msra.mxu0 %v363
    %885 = vmatprep.subr.mxu0 %v426
    %886 = vmatpush2.msra.mxu0 %v425
    %887 = vmatprep.subr.mxu0 %v424
    %888 = vmatpush2.msra.mxu0 %v423
    %889 = vmatprep.subr.mxu0 %v422
    %890 = vmatpush2.msra.mxu0 %v421
    %891 = vmatprep.subr.mxu0 %v420
    %892 = vmatpush2.msra.mxu0 %v419
    %893 = vmatprep.subr.mxu0 %v418
    %894 = vmatpush2.msra.mxu0 %v417
    %895 = vmatprep.subr.mxu0 %v416
    %896 = vmatpush2.msra.mxu0 %v415
    %897 = vmatprep.subr.mxu0 %v414
    %898 = vmatpush2.msra.mxu0 %v413
    %899 = vmatprep.subr.mxu0 %v412
    %900 = vmatpush2.msra.mxu0 %v411
    %901 = vmatprep.subr.mxu0 %v410
    %902 = vmatpush2.msra.mxu0 %v409
    %903 = vmatprep.subr.mxu0 %v408
    %904 = vmatpush2.msra.mxu0 %v407
    %905 = vmatprep.subr.mxu0 %v406
    %906 = vmatpush2.msra.mxu0 %v405
    %907 = vmatprep.subr.mxu0 %v404
    %908 = vmatpush2.msra.mxu0 %v403
    %909 = vmatprep.subr.mxu0 %v402
    %910 = vmatpush2.msra.mxu0 %v401
    %911 = vmatprep.subr.mxu0 %v400
    %912 = vmatpush2.msra.mxu0 %v399
    %913 = vmatprep.subr.mxu0 %v398
    %914 = vmatpush2.msra.mxu0 %v397
    %915 = vmatprep.subr.mxu0 %v396
    %916 = vmatpush2.msra.mxu0 %v395
    %917 = vmatprep.mubr.f32.mxu0 %v848
    %918 = vmatmul.mubr.f32.gmra.mxu0 %v847
    %v919 = vpop.f32.mrf.mxu0
    %v920 = vadd.f32 %v851, %v919
    %v921 = vpop.f32.mrf.mxu0
    %v922 = vadd.f32 %v852, %v921
    %923 = vdwg.mxu0
    %v924 = vtanh.pop %v920
    %v925 = vtanh.pop %v922
    %vm926 = vcmp.lt.s32.totalorder %v849, %v520
    %vm927 = vcmp.lt.s32.totalorder %v850, %v520
    %v928 = vsel %vm926, %v924, %v847
    %v929 = vsel %vm927, %v925, %v848
    %v930 = vadd.s32 %v849, %v433
    %v931 = vadd.s32 %v850, %v434
    %v932 = vld [vmem:[#allocation2 + $0x60] sm:$0xff]
    %v933 = vld [vmem:[#allocation2 + $0x68] sm:$0xff]
    %934 = vmatprep.subr.mxu0 %v394
    %935 = vmatpush1.msra.mxu0 %v393
    %936 = vmatprep.subr.mxu0 %v392
    %937 = vmatpush1.msra.mxu0 %v391
    %938 = vmatprep.subr.mxu0 %v390
    %939 = vmatpush1.msra.mxu0 %v389
    %940 = vmatprep.subr.mxu0 %v388
    %941 = vmatpush1.msra.mxu0 %v387
    %942 = vmatprep.subr.mxu0 %v386
    %943 = vmatpush1.msra.mxu0 %v385
    %944 = vmatprep.subr.mxu0 %v384
    %945 = vmatpush1.msra.mxu0 %v383
    %946 = vmatprep.subr.mxu0 %v382
    %947 = vmatpush1.msra.mxu0 %v381
    %948 = vmatprep.subr.mxu0 %v380
    %949 = vmatpush1.msra.mxu0 %v379
    %950 = vmatprep.subr.mxu0 %v378
    %951 = vmatpush1.msra.mxu0 %v377
    %952 = vmatprep.subr.mxu0 %v376
    %953 = vmatpush1.msra.mxu0 %v375
    %954 = vmatprep.subr.mxu0 %v374
    %955 = vmatpush1.msra.mxu0 %v373
    %956 = vmatprep.subr.mxu0 %v372
    %957 = vmatpush1.msra.mxu0 %v371
    %958 = vmatprep.subr.mxu0 %v370
    %959 = vmatpush1.msra.mxu0 %v369
    %960 = vmatprep.subr.mxu0 %v368
    %961 = vmatpush1.msra.mxu0 %v367
    %962 = vmatprep.subr.mxu0 %v366
    %963 = vmatpush1.msra.mxu0 %v365
    %964 = vmatprep.subr.mxu0 %v364
    %965 = vmatpush1.msra.mxu0 %v363
    %966 = vmatprep.subr.mxu0 %v426
    %967 = vmatpush2.msra.mxu0 %v425
    %968 = vmatprep.subr.mxu0 %v424
    %969 = vmatpush2.msra.mxu0 %v423
    %970 = vmatprep.subr.mxu0 %v422
    %971 = vmatpush2.msra.mxu0 %v421
    %972 = vmatprep.subr.mxu0 %v420
    %973 = vmatpush2.msra.mxu0 %v419
    %974 = vmatprep.subr.mxu0 %v418
    %975 = vmatpush2.msra.mxu0 %v417
    %976 = vmatprep.subr.mxu0 %v416
    %977 = vmatpush2.msra.mxu0 %v415
    %978 = vmatprep.subr.mxu0 %v414
    %979 = vmatpush2.msra.mxu0 %v413
    %980 = vmatprep.subr.mxu0 %v412
    %981 = vmatpush2.msra.mxu0 %v411
    %982 = vmatprep.subr.mxu0 %v410
    %983 = vmatpush2.msra.mxu0 %v409
    %984 = vmatprep.subr.mxu0 %v408
    %985 = vmatpush2.msra.mxu0 %v407
    %986 = vmatprep.subr.mxu0 %v406
    %987 = vmatpush2.msra.mxu0 %v405
    %988 = vmatprep.subr.mxu0 %v404
    %989 = vmatpush2.msra.mxu0 %v403
    %990 = vmatprep.subr.mxu0 %v402
    %991 = vmatpush2.msra.mxu0 %v401
    %992 = vmatprep.subr.mxu0 %v400
    %993 = vmatpush2.msra.mxu0 %v399
    %994 = vmatprep.subr.mxu0 %v398
    %995 = vmatpush2.msra.mxu0 %v397
    %996 = vmatprep.subr.mxu0 %v396
    %997 = vmatpush2.msra.mxu0 %v395
    %998 = vmatprep.mubr.f32.mxu0 %v929
    %999 = vmatmul.mubr.f32.gmra.mxu0 %v928
    %v1000 = vpop.f32.mrf.mxu0
    %v1001 = vadd.f32 %v932, %v1000
    %v1002 = vpop.f32.mrf.mxu0
    %v1003 = vadd.f32 %v933, %v1002
    %1004 = vdwg.mxu0
    %v1005 = vtanh.pop %v1001
    %v1006 = vtanh.pop %v1003
    %vm1007 = vcmp.lt.s32.totalorder %v930, %v520
    %vm1008 = vcmp.lt.s32.totalorder %v931, %v520
    %v1009 = vsel %vm1007, %v1005, %v928
    %v1010 = vsel %vm1008, %v1006, %v929
    %v1011 = vadd.s32 %v930, %v433
    %v1012 = vadd.s32 %v931, %v434
    %v1013 = vld [vmem:[#allocation2 + $0x70] sm:$0xff]
    %v1014 = vld [vmem:[#allocation2 + $0x78] sm:$0xff]
    %1015 = vmatprep.subr.mxu0 %v394
    %1016 = vmatpush1.msra.mxu0 %v393
    %1017 = vmatprep.subr.mxu0 %v392
    %1018 = vmatpush1.msra.mxu0 %v391
    %1019 = vmatprep.subr.mxu0 %v390
    %1020 = vmatpush1.msra.mxu0 %v389
    %1021 = vmatprep.subr.mxu0 %v388
    %1022 = vmatpush1.msra.mxu0 %v387
    %1023 = vmatprep.subr.mxu0 %v386
    %1024 = vmatpush1.msra.mxu0 %v385
    %1025 = vmatprep.subr.mxu0 %v384
    %1026 = vmatpush1.msra.mxu0 %v383
    %1027 = vmatprep.subr.mxu0 %v382
    %1028 = vmatpush1.msra.mxu0 %v381
    %1029 = vmatprep.subr.mxu0 %v380
    %1030 = vmatpush1.msra.mxu0 %v379
    %1031 = vmatprep.subr.mxu0 %v378
    %1032 = vmatpush1.msra.mxu0 %v377
    %1033 = vmatprep.subr.mxu0 %v376
    %1034 = vmatpush1.msra.mxu0 %v375
    %1035 = vmatprep.subr.mxu0 %v374
    %1036 = vmatpush1.msra.mxu0 %v373
    %1037 = vmatprep.subr.mxu0 %v372
    %1038 = vmatpush1.msra.mxu0 %v371
    %1039 = vmatprep.subr.mxu0 %v370
    %1040 = vmatpush1.msra.mxu0 %v369
    %1041 = vmatprep.subr.mxu0 %v368
    %1042 = vmatpush1.msra.mxu0 %v367
    %1043 = vmatprep.subr.mxu0 %v366
    %1044 = vmatpush1.msra.mxu0 %v365
    %1045 = vmatprep.subr.mxu0 %v364
    %1046 = vmatpush1.msra.mxu0 %v363
    %1047 = vmatprep.subr.mxu0 %v426
    %1048 = vmatpush2.msra.mxu0 %v425
    %1049 = vmatprep.subr.mxu0 %v424
    %1050 = vmatpush2.msra.mxu0 %v423
    %1051 = vmatprep.subr.mxu0 %v422
    %1052 = vmatpush2.msra.mxu0 %v421
    %1053 = vmatprep.subr.mxu0 %v420
    %1054 = vmatpush2.msra.mxu0 %v419
    %1055 = vmatprep.subr.mxu0 %v418
    %1056 = vmatpush2.msra.mxu0 %v417
    %1057 = vmatprep.subr.mxu0 %v416
    %1058 = vmatpush2.msra.mxu0 %v415
    %1059 = vmatprep.subr.mxu0 %v414
    %1060 = vmatpush2.msra.mxu0 %v413
    %1061 = vmatprep.subr.mxu0 %v412
    %1062 = vmatpush2.msra.mxu0 %v411
    %1063 = vmatprep.subr.mxu0 %v410
    %1064 = vmatpush2.msra.mxu0 %v409
    %1065 = vmatprep.subr.mxu0 %v408
    %1066 = vmatpush2.msra.mxu0 %v407
    %1067 = vmatprep.subr.mxu0 %v406
    %1068 = vmatpush2.msra.mxu0 %v405
    %1069 = vmatprep.subr.mxu0 %v404
    %1070 = vmatpush2.msra.mxu0 %v403
    %1071 = vmatprep.subr.mxu0 %v402
    %1072 = vmatpush2.msra.mxu0 %v401
    %1073 = vmatprep.subr.mxu0 %v400
    %1074 = vmatpush2.msra.mxu0 %v399
    %1075 = vmatprep.subr.mxu0 %v398
    %1076 = vmatpush2.msra.mxu0 %v397
    %1077 = vmatprep.subr.mxu0 %v396
    %1078 = vmatpush2.msra.mxu0 %v395
    %1079 = vmatprep.mubr.f32.mxu0 %v1010
    %1080 = vmatmul.mubr.f32.gmra.mxu0 %v1009
    %v1081 = vpop.f32.mrf.mxu0
    %v1082 = vadd.f32 %v1013, %v1081
    %v1083 = vpop.f32.mrf.mxu0
    %v1084 = vadd.f32 %v1014, %v1083
    %1085 = vdwg.mxu0
    %v1086 = vtanh.pop %v1082
    %v1087 = vtanh.pop %v1084
    %vm1088 = vcmp.lt.s32.totalorder %v1011, %v520
    %vm1089 = vcmp.lt.s32.totalorder %v1012, %v520
    %v1090 = vsel %vm1088, %v1086, %v1009
    %v1091 = vsel %vm1089, %v1087, %v1010
    %1092 = vst [vmem:[#allocation6] sm:$0xff] %v1090
    %1093 = vst [vmem:[#allocation6 + $0x8] sm:$0xff] %v1091
    // Predicated region
    $region42: #{tpu_custom_call.1} parent=1 // pred_check
      _
    $region43: #{tpu_custom_call.1} parent=1 // pred_check_branch
      %1095 = sbr.rel (0) target = $region45
    $region44: #{tpu_custom_call.1} parent=1 // pred_region
      %s1097 = ssub.s32 256, 256
      %1098 = vsyncadd [#allocation5], %s1097
      %s1100 = sshll.u32 [#allocation6], 4
      %s1101 = int_to_ptr.vmem [resolvable:$true] %s1100
      %1103 = dma.vmem_to_hbm [thread:$0]  %s1101, 256, %s8, [#allocation5]
    $region45: #{tpu_custom_call.1} parent=1 // pred_fallthru
      _
    // Predicated region
    $region46: #{tpu_custom_call.1} parent=1 // pred_check
      _
    $region47: #{tpu_custom_call.1} parent=1 // pred_check_branch
      %1105 = sbr.rel (0) target = $region49
    $region48: #{tpu_custom_call.1} parent=1 // pred_region
      %1106 = dma.done [#allocation5], 256
    $region49: #{tpu_custom_call.1} parent=1 // pred_fallthru
      _
    %1107 = vsyncpa [#allocation4], 1
    %1108 = vsyncpa [#allocation5], 1

</llo_original>
